<compile_context>
chip_gen: v7x
topology: tpu7x:2x2x1
jax: 0.10.0
libtpu: 0.0.40
codegen_flags: <defaults>
</compile_context>

<pallas_src>
import jax
import jax.numpy as jnp
from jax.experimental import pallas as pl
from jax.experimental.pallas import tpu as pltpu


def mlp_kernel(x_ref, w1_ref, b1_ref, w2_ref, b2_ref, o_ref, h_ref):
    x = x_ref[...]        # (TM, 5)  f32
    w1 = w1_ref[...]      # (5, 10)
    w2 = w2_ref[...]      # (10, 2)

    # Layer 1: z1 = x @ W1 + b1 as K=5 rank-1 VPU updates (statically unrolled).
    z1 = b1_ref[...] + x[:, 0:1] * w1[0:1, :]          # (TM, 10)
    for k in range(1, w1.shape[0]):
        z1 = z1 + x[:, k:k + 1] * w1[k:k + 1, :]
    h = jax.nn.sigmoid(z1)
    h_ref[...] = h                                      # exact-width (TM, 10) store

    # Layer 2: z2 = h @ W2 + b2 as K=10 rank-1 VPU updates.
    z2 = b2_ref[...] + h[:, 0:1] * w2[0:1, :]           # (TM, 2)
    for k in range(1, w2.shape[0]):
        z2 = z2 + h[:, k:k + 1] * w2[k:k + 1, :]
    o_ref[...] = jax.nn.sigmoid(z2)                     # exact-width (TM, 2) store


def mlp_forward(x, w1, b1, w2, b2, *, tm=4096):
    """x: (B, 5) f32; w1: (5, 10); b1: (1, 10); w2: (10, 2); b2: (1, 2).

    Returns (o, h) with shapes (B, 2) and (B, 10), matching the PyTorch module.
    """
    B, in_f = x.shape
    hid = w1.shape[1]
    out_f = w2.shape[1]

    # Batch tile: multiple of 8, capped at `tm`.  The grid covers B with
    # cdiv(B, TM) steps; Pallas handles the ragged last block (OOB rows of the
    # outputs are discarded, so no batch padding / post-slicing is needed).
    TM = min(tm, pl.cdiv(B, 8) * 8)
    grid = (pl.cdiv(B, TM),)

    bytes_accessed = 4 * (B * (in_f + hid + out_f)
                          + in_f * hid + hid + hid * out_f + out_f)
    cost = pl.CostEstimate(
        flops=2 * B * (in_f * hid + hid * out_f),
        transcendentals=B * (hid + out_f),
        bytes_accessed=bytes_accessed,
    )

    o, h = pl.pallas_call(
        mlp_kernel,
        out_shape=(
            jax.ShapeDtypeStruct((B, out_f), jnp.float32),
            jax.ShapeDtypeStruct((B, hid), jnp.float32),
        ),
        grid=grid,
        in_specs=[
            # Activations: tiled along batch, double-buffered by Pallas.
            pl.BlockSpec((TM, in_f), lambda i: (i, 0)),
            # Weights / biases: same (full-array) block every step -> VMEM-resident.
            pl.BlockSpec((in_f, hid), lambda i: (0, 0)),
            pl.BlockSpec((1, hid), lambda i: (0, 0)),
            pl.BlockSpec((hid, out_f), lambda i: (0, 0)),
            pl.BlockSpec((1, out_f), lambda i: (0, 0)),
        ],
        out_specs=(
            pl.BlockSpec((TM, out_f), lambda i: (i, 0)),
            pl.BlockSpec((TM, hid), lambda i: (i, 0)),
        ),
        compiler_params=pltpu.CompilerParams(
            dimension_semantics=("parallel",),
        ),
        cost_estimate=cost,
    )(x, w1, b1, w2, b2)

    return o, h


def init_params(key):
    # Deterministic init mimicking PyTorch nn.Linear default
    # (uniform(-1/sqrt(fan_in), +1/sqrt(fan_in))).  Stored as (in, out).
    k1, k2, k3, k4 = jax.random.split(key, 4)
    in1, out1 = 5, 10
    in2, out2 = 10, 2
    lim1 = 1.0 / jnp.sqrt(in1)
    lim2 = 1.0 / jnp.sqrt(in2)
    w1 = jax.random.uniform(k1, (in1, out1), jnp.float32, -lim1, lim1)
    b1 = jax.random.uniform(k2, (1, out1), jnp.float32, -lim1, lim1)
    w2 = jax.random.uniform(k3, (in2, out2), jnp.float32, -lim2, lim2)
    b2 = jax.random.uniform(k4, (1, out2), jnp.float32, -lim2, lim2)
    return w1, b1, w2, b2


def _ref_forward(x, w1, b1, w2, b2):
    h = jax.nn.sigmoid(x @ w1 + b1)
    o = jax.nn.sigmoid(h @ w2 + b2)
    return o, h


if __name__ == "__main__":
    key = jax.random.PRNGKey(0)
    kx, kx2, kp = jax.random.split(key, 3)

    w1, b1, w2, b2 = init_params(kp)

    # Check 1: small batch, single grid step.
    B = 8
    x = jax.random.normal(kx, (B, 5), jnp.float32)
    fwd = jax.jit(mlp_forward)
    o, h = fwd(x, w1, b1, w2, b2)
    o = jax.block_until_ready(o)
    h = jax.block_until_ready(h)
    o_ref, h_ref = _ref_forward(x, w1, b1, w2, b2)
    assert o.shape == (B, 2) and h.shape == (B, 10)
    assert jnp.allclose(h, h_ref, atol=1e-5), "hidden mismatch"
    assert jnp.allclose(o, o_ref, atol=1e-5), "output mismatch"

    # Check 2: multi-step grid with a ragged last batch block (verifies that
    # out-of-bounds rows of the edge block are discarded).
    B2 = 20
    x2 = jax.random.normal(kx2, (B2, 5), jnp.float32)
    fwd_small_tile = jax.jit(lambda xx, a, b, c, d: mlp_forward(xx, a, b, c, d, tm=8))
    o2, h2 = fwd_small_tile(x2, w1, b1, w2, b2)
    o2 = jax.block_until_ready(o2)
    h2 = jax.block_until_ready(h2)
    o2_ref, h2_ref = _ref_forward(x2, w1, b1, w2, b2)
    assert o2.shape == (B2, 2) and h2.shape == (B2, 10)
    assert jnp.allclose(h2, h2_ref, atol=1e-5), "hidden mismatch (ragged)"
    assert jnp.allclose(o2, o2_ref, atol=1e-5), "output mismatch (ragged)"

    print("KERNEL_OK")
</pallas_src>

<mosaic_0001>
module attributes {stable_mosaic.version = 11 : i64} {
  func.func @mlp_kernel(%arg0: i32, %arg1: memref<8x5xf32, #tpu.memory_space<vmem>>, %arg2: memref<5x10xf32, #tpu.memory_space<vmem>>, %arg3: memref<1x10xf32, #tpu.memory_space<vmem>>, %arg4: memref<10x2xf32, #tpu.memory_space<vmem>>, %arg5: memref<1x2xf32, #tpu.memory_space<vmem>>, %arg6: memref<8x2xf32, #tpu.memory_space<vmem>>, %arg7: memref<8x10xf32, #tpu.memory_space<vmem>>) attributes {dimension_semantics = [#tpu.dimension_semantics<parallel>], iteration_bounds = array<i64: 1>, scalar_prefetch = 0 : i64, scratch_operands = 0 : i64, tpu.core_type = #tpu.core_type<tc>, window_params = [{transform_indices = @transform_0, window_bounds = array<i64: 8, 5>}, {pipeline_mode = #tpu.pipeline_mode<synchronous>, transform_indices = @transform_1, window_bounds = array<i64: 5, 10>}, {pipeline_mode = #tpu.pipeline_mode<synchronous>, transform_indices = @transform_2, window_bounds = array<i64: 1, 10>}, {pipeline_mode = #tpu.pipeline_mode<synchronous>, transform_indices = @transform_3, window_bounds = array<i64: 10, 2>}, {pipeline_mode = #tpu.pipeline_mode<synchronous>, transform_indices = @transform_4, window_bounds = array<i64: 1, 2>}, {transform_indices = @transform_5, window_bounds = array<i64: 8, 2>}, {transform_indices = @transform_6, window_bounds = array<i64: 8, 10>}]} {
    %c0 = arith.constant 0 : index
    %c0_0 = arith.constant 0 : index
    %0 = vector.load %arg1[%c0, %c0_0] : memref<8x5xf32, #tpu.memory_space<vmem>>, vector<8x5xf32>
    %c0_1 = arith.constant 0 : index
    %c0_2 = arith.constant 0 : index
    %1 = vector.load %arg2[%c0_1, %c0_2] : memref<5x10xf32, #tpu.memory_space<vmem>>, vector<5x10xf32>
    %c0_3 = arith.constant 0 : index
    %c0_4 = arith.constant 0 : index
    %2 = vector.load %arg4[%c0_3, %c0_4] : memref<10x2xf32, #tpu.memory_space<vmem>>, vector<10x2xf32>
    %c0_5 = arith.constant 0 : index
    %c0_6 = arith.constant 0 : index
    %3 = vector.load %arg3[%c0_5, %c0_6] : memref<1x10xf32, #tpu.memory_space<vmem>>, vector<1x10xf32>
    %4 = vector.extract_strided_slice %0 {offsets = [0, 0], sizes = [8, 1], strides = [1, 1]} : vector<8x5xf32> to vector<8x1xf32>
    %5 = vector.extract_strided_slice %1 {offsets = [0, 0], sizes = [1, 10], strides = [1, 1]} : vector<5x10xf32> to vector<1x10xf32>
    %6 = vector.broadcast %4 : vector<8x1xf32> to vector<8x10xf32>
    %7 = vector.broadcast %5 : vector<1x10xf32> to vector<8x10xf32>
    %8 = arith.mulf %6, %7 : vector<8x10xf32>
    %9 = vector.broadcast %3 : vector<1x10xf32> to vector<8x10xf32>
    %10 = arith.addf %9, %8 : vector<8x10xf32>
    %11 = vector.extract_strided_slice %0 {offsets = [0, 1], sizes = [8, 1], strides = [1, 1]} : vector<8x5xf32> to vector<8x1xf32>
    %12 = vector.extract_strided_slice %1 {offsets = [1, 0], sizes = [1, 10], strides = [1, 1]} : vector<5x10xf32> to vector<1x10xf32>
    %13 = vector.broadcast %11 : vector<8x1xf32> to vector<8x10xf32>
    %14 = vector.broadcast %12 : vector<1x10xf32> to vector<8x10xf32>
    %15 = arith.mulf %13, %14 : vector<8x10xf32>
    %16 = arith.addf %10, %15 : vector<8x10xf32>
    %17 = vector.extract_strided_slice %0 {offsets = [0, 2], sizes = [8, 1], strides = [1, 1]} : vector<8x5xf32> to vector<8x1xf32>
    %18 = vector.extract_strided_slice %1 {offsets = [2, 0], sizes = [1, 10], strides = [1, 1]} : vector<5x10xf32> to vector<1x10xf32>
    %19 = vector.broadcast %17 : vector<8x1xf32> to vector<8x10xf32>
    %20 = vector.broadcast %18 : vector<1x10xf32> to vector<8x10xf32>
    %21 = arith.mulf %19, %20 : vector<8x10xf32>
    %22 = arith.addf %16, %21 : vector<8x10xf32>
    %23 = vector.extract_strided_slice %0 {offsets = [0, 3], sizes = [8, 1], strides = [1, 1]} : vector<8x5xf32> to vector<8x1xf32>
    %24 = vector.extract_strided_slice %1 {offsets = [3, 0], sizes = [1, 10], strides = [1, 1]} : vector<5x10xf32> to vector<1x10xf32>
    %25 = vector.broadcast %23 : vector<8x1xf32> to vector<8x10xf32>
    %26 = vector.broadcast %24 : vector<1x10xf32> to vector<8x10xf32>
    %27 = arith.mulf %25, %26 : vector<8x10xf32>
    %28 = arith.addf %22, %27 : vector<8x10xf32>
    %29 = vector.extract_strided_slice %0 {offsets = [0, 4], sizes = [8, 1], strides = [1, 1]} : vector<8x5xf32> to vector<8x1xf32>
    %30 = vector.extract_strided_slice %1 {offsets = [4, 0], sizes = [1, 10], strides = [1, 1]} : vector<5x10xf32> to vector<1x10xf32>
    %31 = vector.broadcast %29 : vector<8x1xf32> to vector<8x10xf32>
    %32 = vector.broadcast %30 : vector<1x10xf32> to vector<8x10xf32>
    %33 = arith.mulf %31, %32 : vector<8x10xf32>
    %34 = arith.addf %28, %33 : vector<8x10xf32>
    %35 = arith.negf %34 : vector<8x10xf32>
    %36 = math.exp %35 : vector<8x10xf32>
    %cst = arith.constant 1.000000e+00 : f32
    %37 = vector.broadcast %cst : f32 to vector<8x10xf32>
    %38 = arith.addf %37, %36 : vector<8x10xf32>
    %39 = arith.divf %37, %38 : vector<8x10xf32>
    %c0_7 = arith.constant 0 : index
    %c0_8 = arith.constant 0 : index
    %40 = vector.load %arg7[%c0_7, %c0_8] : memref<8x10xf32, #tpu.memory_space<vmem>>, vector<8x10xf32>
    tpu.vector_store %arg7[%c0_7, %c0_8], %39 {strides = array<i32>} : memref<8x10xf32, #tpu.memory_space<vmem>>, vector<8x10xf32>,
    %c0_9 = arith.constant 0 : index
    %c0_10 = arith.constant 0 : index
    %41 = vector.load %arg5[%c0_9, %c0_10] : memref<1x2xf32, #tpu.memory_space<vmem>>, vector<1x2xf32>
    %42 = vector.extract_strided_slice %39 {offsets = [0, 0], sizes = [8, 1], strides = [1, 1]} : vector<8x10xf32> to vector<8x1xf32>
    %43 = vector.extract_strided_slice %2 {offsets = [0, 0], sizes = [1, 2], strides = [1, 1]} : vector<10x2xf32> to vector<1x2xf32>
    %44 = vector.broadcast %42 : vector<8x1xf32> to vector<8x2xf32>
    %45 = vector.broadcast %43 : vector<1x2xf32> to vector<8x2xf32>
    %46 = arith.mulf %44, %45 : vector<8x2xf32>
    %47 = vector.broadcast %41 : vector<1x2xf32> to vector<8x2xf32>
    %48 = arith.addf %47, %46 : vector<8x2xf32>
    %49 = vector.extract_strided_slice %39 {offsets = [0, 1], sizes = [8, 1], strides = [1, 1]} : vector<8x10xf32> to vector<8x1xf32>
    %50 = vector.extract_strided_slice %2 {offsets = [1, 0], sizes = [1, 2], strides = [1, 1]} : vector<10x2xf32> to vector<1x2xf32>
    %51 = vector.broadcast %49 : vector<8x1xf32> to vector<8x2xf32>
    %52 = vector.broadcast %50 : vector<1x2xf32> to vector<8x2xf32>
    %53 = arith.mulf %51, %52 : vector<8x2xf32>
    %54 = arith.addf %48, %53 : vector<8x2xf32>
    %55 = vector.extract_strided_slice %39 {offsets = [0, 2], sizes = [8, 1], strides = [1, 1]} : vector<8x10xf32> to vector<8x1xf32>
    %56 = vector.extract_strided_slice %2 {offsets = [2, 0], sizes = [1, 2], strides = [1, 1]} : vector<10x2xf32> to vector<1x2xf32>
    %57 = vector.broadcast %55 : vector<8x1xf32> to vector<8x2xf32>
    %58 = vector.broadcast %56 : vector<1x2xf32> to vector<8x2xf32>
    %59 = arith.mulf %57, %58 : vector<8x2xf32>
    %60 = arith.addf %54, %59 : vector<8x2xf32>
    %61 = vector.extract_strided_slice %39 {offsets = [0, 3], sizes = [8, 1], strides = [1, 1]} : vector<8x10xf32> to vector<8x1xf32>
    %62 = vector.extract_strided_slice %2 {offsets = [3, 0], sizes = [1, 2], strides = [1, 1]} : vector<10x2xf32> to vector<1x2xf32>
    %63 = vector.broadcast %61 : vector<8x1xf32> to vector<8x2xf32>
    %64 = vector.broadcast %62 : vector<1x2xf32> to vector<8x2xf32>
    %65 = arith.mulf %63, %64 : vector<8x2xf32>
    %66 = arith.addf %60, %65 : vector<8x2xf32>
    %67 = vector.extract_strided_slice %39 {offsets = [0, 4], sizes = [8, 1], strides = [1, 1]} : vector<8x10xf32> to vector<8x1xf32>
    %68 = vector.extract_strided_slice %2 {offsets = [4, 0], sizes = [1, 2], strides = [1, 1]} : vector<10x2xf32> to vector<1x2xf32>
    %69 = vector.broadcast %67 : vector<8x1xf32> to vector<8x2xf32>
    %70 = vector.broadcast %68 : vector<1x2xf32> to vector<8x2xf32>
    %71 = arith.mulf %69, %70 : vector<8x2xf32>
    %72 = arith.addf %66, %71 : vector<8x2xf32>
    %73 = vector.extract_strided_slice %39 {offsets = [0, 5], sizes = [8, 1], strides = [1, 1]} : vector<8x10xf32> to vector<8x1xf32>
    %74 = vector.extract_strided_slice %2 {offsets = [5, 0], sizes = [1, 2], strides = [1, 1]} : vector<10x2xf32> to vector<1x2xf32>
    %75 = vector.broadcast %73 : vector<8x1xf32> to vector<8x2xf32>
    %76 = vector.broadcast %74 : vector<1x2xf32> to vector<8x2xf32>
    %77 = arith.mulf %75, %76 : vector<8x2xf32>
    %78 = arith.addf %72, %77 : vector<8x2xf32>
    %79 = vector.extract_strided_slice %39 {offsets = [0, 6], sizes = [8, 1], strides = [1, 1]} : vector<8x10xf32> to vector<8x1xf32>
    %80 = vector.extract_strided_slice %2 {offsets = [6, 0], sizes = [1, 2], strides = [1, 1]} : vector<10x2xf32> to vector<1x2xf32>
    %81 = vector.broadcast %79 : vector<8x1xf32> to vector<8x2xf32>
    %82 = vector.broadcast %80 : vector<1x2xf32> to vector<8x2xf32>
    %83 = arith.mulf %81, %82 : vector<8x2xf32>
    %84 = arith.addf %78, %83 : vector<8x2xf32>
    %85 = vector.extract_strided_slice %39 {offsets = [0, 7], sizes = [8, 1], strides = [1, 1]} : vector<8x10xf32> to vector<8x1xf32>
    %86 = vector.extract_strided_slice %2 {offsets = [7, 0], sizes = [1, 2], strides = [1, 1]} : vector<10x2xf32> to vector<1x2xf32>
    %87 = vector.broadcast %85 : vector<8x1xf32> to vector<8x2xf32>
    %88 = vector.broadcast %86 : vector<1x2xf32> to vector<8x2xf32>
    %89 = arith.mulf %87, %88 : vector<8x2xf32>
    %90 = arith.addf %84, %89 : vector<8x2xf32>
    %91 = vector.extract_strided_slice %39 {offsets = [0, 8], sizes = [8, 1], strides = [1, 1]} : vector<8x10xf32> to vector<8x1xf32>
    %92 = vector.extract_strided_slice %2 {offsets = [8, 0], sizes = [1, 2], strides = [1, 1]} : vector<10x2xf32> to vector<1x2xf32>
    %93 = vector.broadcast %91 : vector<8x1xf32> to vector<8x2xf32>
    %94 = vector.broadcast %92 : vector<1x2xf32> to vector<8x2xf32>
    %95 = arith.mulf %93, %94 : vector<8x2xf32>
    %96 = arith.addf %90, %95 : vector<8x2xf32>
    %97 = vector.extract_strided_slice %39 {offsets = [0, 9], sizes = [8, 1], strides = [1, 1]} : vector<8x10xf32> to vector<8x1xf32>
    %98 = vector.extract_strided_slice %2 {offsets = [9, 0], sizes = [1, 2], strides = [1, 1]} : vector<10x2xf32> to vector<1x2xf32>
    %99 = vector.broadcast %97 : vector<8x1xf32> to vector<8x2xf32>
    %100 = vector.broadcast %98 : vector<1x2xf32> to vector<8x2xf32>
    %101 = arith.mulf %99, %100 : vector<8x2xf32>
    %102 = arith.addf %96, %101 : vector<8x2xf32>
    %103 = arith.negf %102 : vector<8x2xf32>
    %104 = math.exp %103 : vector<8x2xf32>
    %cst_11 = arith.constant 1.000000e+00 : f32
    %105 = vector.broadcast %cst_11 : f32 to vector<8x2xf32>
    %106 = arith.addf %105, %104 : vector<8x2xf32>
    %107 = arith.divf %105, %106 : vector<8x2xf32>
    %c0_12 = arith.constant 0 : index
    %c0_13 = arith.constant 0 : index
    %108 = vector.load %arg6[%c0_12, %c0_13] : memref<8x2xf32, #tpu.memory_space<vmem>>, vector<8x2xf32>
    tpu.vector_store %arg6[%c0_12, %c0_13], %107 {strides = array<i32>} : memref<8x2xf32, #tpu.memory_space<vmem>>, vector<8x2xf32>,
    return
  }
  func.func @transform_0(%arg0: i32) -> (i32, i32) {
    %c0_i32 = arith.constant 0 : i32
    %c0_i32_0 = arith.constant 0 : i32
    return %arg0, %c0_i32 : i32, i32
  }
  func.func @transform_1(%arg0: i32) -> (i32, i32) {
    %c0_i32 = arith.constant 0 : i32
    %c0_i32_0 = arith.constant 0 : i32
    %c0_i32_1 = arith.constant 0 : i32
    return %c0_i32, %c0_i32_0 : i32, i32
  }
  func.func @transform_2(%arg0: i32) -> (i32, i32) {
    %c0_i32 = arith.constant 0 : i32
    %c0_i32_0 = arith.constant 0 : i32
    %c0_i32_1 = arith.constant 0 : i32
    return %c0_i32, %c0_i32_0 : i32, i32
  }
  func.func @transform_3(%arg0: i32) -> (i32, i32) {
    %c0_i32 = arith.constant 0 : i32
    %c0_i32_0 = arith.constant 0 : i32
    %c0_i32_1 = arith.constant 0 : i32
    return %c0_i32, %c0_i32_0 : i32, i32
  }
  func.func @transform_4(%arg0: i32) -> (i32, i32) {
    %c0_i32 = arith.constant 0 : i32
    %c0_i32_0 = arith.constant 0 : i32
    %c0_i32_1 = arith.constant 0 : i32
    return %c0_i32, %c0_i32_0 : i32, i32
  }
  func.func @transform_5(%arg0: i32) -> (i32, i32) {
    %c0_i32 = arith.constant 0 : i32
    %c0_i32_0 = arith.constant 0 : i32
    return %arg0, %c0_i32 : i32, i32
  }
  func.func @transform_6(%arg0: i32) -> (i32, i32) {
    %c0_i32 = arith.constant 0 : i32
    %c0_i32_0 = arith.constant 0 : i32
    return %arg0, %c0_i32 : i32, i32
  }
}

</mosaic_0001>

<llo_original>
// kernel: mlp_forward.1
$region0: #{mlp_forward.1}
  #allocation0 [shape = 'u32[]', space=smem, size = 0x4, offset = 0x4, fixed_abs, tag = 'smem constant byte address 0x4 - core index']
  #allocation1 [shape = 'u32[144,128]{1,0:T(1,128)}', space=vmem, size = 0x12000, scoped, tag = 'internal scratch']
  %s0 = inlined_call_operand.vmem [shape: f32[8,5], index: 0, kind: input, shape index: {}]
  %s1 = inlined_call_operand.vmem [shape: f32[5,10], index: 1, kind: input, shape index: {}]
  %s2 = inlined_call_operand.vmem [shape: f32[1,10], index: 2, kind: input, shape index: {}]
  %s3 = inlined_call_operand.vmem [shape: f32[10,2], index: 3, kind: input, shape index: {}]
  %s4 = inlined_call_operand.vmem [shape: f32[1,2], index: 4, kind: input, shape index: {}]
  %s5 = inlined_call_operand.vmem [shape: f32[8,2], index: 5, kind: output, shape index: {0}]
  %s6 = inlined_call_operand.hbm [shape: f32[8,10], index: 6, kind: output, shape index: {1}]
  %7 = xla_tuple %s5, %s6
  %s8 = sld [smem:[#allocation0]]
  $region38: #{mlp_forward.1} parent=0
    _
  %s10 = ssub.s32 1, %s8
  %s11 = scalar_select 0, %s10, %s8
  $region1: #{mlp_forward.1} parent=0
    #allocation2 [shape = 'u8[4096]{0}', space=vmem, size = 0x1000, scoped, tag = 'output window, operand 1, single buffered']
    #allocation3 [shape = 's32[1]{0}', space=sflag, size = 0x4, scoped, tag = 'scoped memory for mlp_forward.1']
    %12 = vsyncpa [#allocation3], 0
    // Predicated region
    $region2: #{mlp_forward.1} parent=1 // pred_check
      _
    $region3: #{mlp_forward.1} parent=1 // pred_check_branch
      %14 = sbr.rel (0) target = $region5
    $region4: #{mlp_forward.1} parent=1 // pred_region
      _
    $region5: #{mlp_forward.1} parent=1 // pred_fallthru
      _
    // Predicated region
    $region6: #{mlp_forward.1} parent=1 // pred_check
      _
    $region7: #{mlp_forward.1} parent=1 // pred_check_branch
      %16 = sbr.rel (0) target = $region9
    $region8: #{mlp_forward.1} parent=1 // pred_region
      _
    $region9: #{mlp_forward.1} parent=1 // pred_fallthru
      _
    // Predicated region
    $region10: #{mlp_forward.1} parent=1 // pred_check
      _
    $region11: #{mlp_forward.1} parent=1 // pred_check_branch
      %18 = sbr.rel (0) target = $region13
    $region12: #{mlp_forward.1} parent=1 // pred_region
      _
    $region13: #{mlp_forward.1} parent=1 // pred_fallthru
      _
    // Predicated region
    $region14: #{mlp_forward.1} parent=1 // pred_check
      _
    $region15: #{mlp_forward.1} parent=1 // pred_check_branch
      %20 = sbr.rel (0) target = $region17
    $region16: #{mlp_forward.1} parent=1 // pred_region
      _
    $region17: #{mlp_forward.1} parent=1 // pred_fallthru
      _
    // Predicated region
    $region18: #{mlp_forward.1} parent=1 // pred_check
      _
    $region19: #{mlp_forward.1} parent=1 // pred_check_branch
      %22 = sbr.rel (0) target = $region21
    $region20: #{mlp_forward.1} parent=1 // pred_region
      _
    $region21: #{mlp_forward.1} parent=1 // pred_fallthru
      _
    %v23 = vld [vmem:[%s0] sm:$0xff]
    %v24 = vld [vmem:[%s1] sm:$0x1f]
    %v25 = vld [vmem:[%s3] sm:$0xff]
    %v26 = vld [vmem:[%s3 + $0x8] sm:$0x3]
    %v27 = vld [vmem:[%s2] sm:$0x1]
    %29 = vset.pattern.permute.xlu0 0
    %30 = vperm.xlu0 %29, %v23
    %v31 = vpop.permute.xlu0 %30
    %v33 = vlaneseq
    %v34 = vshrl.u32 %v33, 7
    %v35 = vsub.s32 0, %v34
    %v36 = vrot.slane %v24, %v35
    %v37 = vmul.f32 %v31, %v36
    %v39 = vlaneseq
    %v40 = vshrl.u32 %v39, 7
    %v41 = vsub.s32 0, %v40
    %v42 = vrot.slane %v27, %v41
    %v44 = vadd.f32 %v42, %v37
    %45 = vset.pattern.permute.xlu0 1
    %46 = vperm.xlu0 %45, %v23
    %v47 = vpop.permute.xlu0 %46
    %v49 = vlaneseq
    %v50 = vshrl.u32 %v49, 7
    %v51 = vsub.s32 1, %v50
    %v52 = vrot.slane %v24, %v51
    %v53 = vmul.f32 %v47, %v52
    %v54 = vadd.f32 %v44, %v53
    %55 = vset.pattern.permute.xlu0 2
    %56 = vperm.xlu0 %55, %v23
    %v57 = vpop.permute.xlu0 %56
    %v59 = vlaneseq
    %v60 = vshrl.u32 %v59, 7
    %v61 = vsub.s32 2, %v60
    %v62 = vrot.slane %v24, %v61
    %v63 = vmul.f32 %v57, %v62
    %v64 = vadd.f32 %v54, %v63
    %65 = vset.pattern.permute.xlu0 3
    %66 = vperm.xlu0 %65, %v23
    %v67 = vpop.permute.xlu0 %66
    %v69 = vlaneseq
    %v70 = vshrl.u32 %v69, 7
    %v71 = vsub.s32 3, %v70
    %v72 = vrot.slane %v24, %v71
    %v73 = vmul.f32 %v67, %v72
    %v74 = vadd.f32 %v64, %v73
    %75 = vset.pattern.permute.xlu0 4
    %76 = vperm.xlu0 %75, %v23
    %v77 = vpop.permute.xlu0 %76
    %v79 = vlaneseq
    %v80 = vshrl.u32 %v79, 7
    %v81 = vsub.s32 4, %v80
    %v82 = vrot.slane %v24, %v81
    %v83 = vmul.f32 %v77, %v82
    %v84 = vadd.f32 %v74, %v83
    %v85 = vxor.u32 %v84, 2147483648
    %v86 = vmul.f32 %v85, 1.442695
    %v87 = vpow.pop %v86
    %v88 = vadd.f32 %v87, 1.0
    %v89 = vrcp.pop %v88
    %v90 = vmul.f32 1.0, %v89
    %vm91 = vcmask 80896
    %92 = vst.msk [vmem:[#allocation2] sm:$0xff] %vm91, %v90
    %v93 = vld [vmem:[%s4] sm:$0x1]
    %95 = vset.pattern.permute.xlu0 0
    %96 = vperm.xlu0 %95, %v90
    %v97 = vpop.permute.xlu0 %96
    %v99 = vlaneseq
    %v100 = vshrl.u32 %v99, 7
    %v101 = vsub.s32 0, %v100
    %v102 = vrot.slane %v25, %v101
    %v103 = vmul.f32 %v97, %v102
    %v105 = vlaneseq
    %v106 = vshrl.u32 %v105, 7
    %v107 = vsub.s32 0, %v106
    %v108 = vrot.slane %v93, %v107
    %v110 = vadd.f32 %v108, %v103
    %111 = vset.pattern.permute.xlu0 1
    %112 = vperm.xlu0 %111, %v90
    %v113 = vpop.permute.xlu0 %112
    %v115 = vlaneseq
    %v116 = vshrl.u32 %v115, 7
    %v117 = vsub.s32 1, %v116
    %v118 = vrot.slane %v25, %v117
    %v119 = vmul.f32 %v113, %v118
    %v120 = vadd.f32 %v110, %v119
    %121 = vset.pattern.permute.xlu0 2
    %122 = vperm.xlu0 %121, %v90
    %v123 = vpop.permute.xlu0 %122
    %v125 = vlaneseq
    %v126 = vshrl.u32 %v125, 7
    %v127 = vsub.s32 2, %v126
    %v128 = vrot.slane %v25, %v127
    %v129 = vmul.f32 %v123, %v128
    %v130 = vadd.f32 %v120, %v129
    %131 = vset.pattern.permute.xlu0 3
    %132 = vperm.xlu0 %131, %v90
    %v133 = vpop.permute.xlu0 %132
    %v135 = vlaneseq
    %v136 = vshrl.u32 %v135, 7
    %v137 = vsub.s32 3, %v136
    %v138 = vrot.slane %v25, %v137
    %v139 = vmul.f32 %v133, %v138
    %v140 = vadd.f32 %v130, %v139
    %141 = vset.pattern.permute.xlu0 4
    %142 = vperm.xlu0 %141, %v90
    %v143 = vpop.permute.xlu0 %142
    %v145 = vlaneseq
    %v146 = vshrl.u32 %v145, 7
    %v147 = vsub.s32 4, %v146
    %v148 = vrot.slane %v25, %v147
    %v149 = vmul.f32 %v143, %v148
    %v150 = vadd.f32 %v140, %v149
    %151 = vset.pattern.permute.xlu0 5
    %152 = vperm.xlu0 %151, %v90
    %v153 = vpop.permute.xlu0 %152
    %v155 = vlaneseq
    %v156 = vshrl.u32 %v155, 7
    %v157 = vsub.s32 5, %v156
    %v158 = vrot.slane %v25, %v157
    %v159 = vmul.f32 %v153, %v158
    %v160 = vadd.f32 %v150, %v159
    %161 = vset.pattern.permute.xlu0 6
    %162 = vperm.xlu0 %161, %v90
    %v163 = vpop.permute.xlu0 %162
    %v165 = vlaneseq
    %v166 = vshrl.u32 %v165, 7
    %v167 = vsub.s32 6, %v166
    %v168 = vrot.slane %v25, %v167
    %v169 = vmul.f32 %v163, %v168
    %v170 = vadd.f32 %v160, %v169
    %171 = vset.pattern.permute.xlu0 7
    %172 = vperm.xlu0 %171, %v90
    %v173 = vpop.permute.xlu0 %172
    %v175 = vlaneseq
    %v176 = vshrl.u32 %v175, 7
    %v177 = vsub.s32 7, %v176
    %v178 = vrot.slane %v25, %v177
    %v179 = vmul.f32 %v173, %v178
    %v180 = vadd.f32 %v170, %v179
    %181 = vset.pattern.permute.xlu0 8
    %182 = vperm.xlu0 %181, %v90
    %v183 = vpop.permute.xlu0 %182
    %v185 = vlaneseq
    %v186 = vshrl.u32 %v185, 7
    %v187 = vsub.s32 0, %v186
    %v188 = vrot.slane %v26, %v187
    %v189 = vmul.f32 %v183, %v188
    %v190 = vadd.f32 %v180, %v189
    %191 = vset.pattern.permute.xlu0 9
    %192 = vperm.xlu0 %191, %v90
    %v193 = vpop.permute.xlu0 %192
    %v195 = vlaneseq
    %v196 = vshrl.u32 %v195, 7
    %v197 = vsub.s32 1, %v196
    %v198 = vrot.slane %v26, %v197
    %v199 = vmul.f32 %v193, %v198
    %v200 = vadd.f32 %v190, %v199
    %v201 = vxor.u32 %v200, 2147483648
    %v202 = vmul.f32 %v201, 1.442695
    %v203 = vpow.pop %v202
    %v204 = vadd.f32 %v203, 1.0
    %v205 = vrcp.pop %v204
    %v206 = vmul.f32 1.0, %v205
    %vm207 = vcmask 15360
    %208 = vst.msk [vmem:[%s5] sm:$0xff] %vm207, %v206
    // Predicated region
    $region22: #{mlp_forward.1} parent=1 // pred_check
      _
    $region23: #{mlp_forward.1} parent=1 // pred_check_branch
      %210 = sbr.rel (0) target = $region25
    $region24: #{mlp_forward.1} parent=1 // pred_region
      _
    $region25: #{mlp_forward.1} parent=1 // pred_fallthru
      _
    // Predicated region
    $region26: #{mlp_forward.1} parent=1 // pred_check
      _
    $region27: #{mlp_forward.1} parent=1 // pred_check_branch
      %212 = sbr.rel (0) target = $region29
    $region28: #{mlp_forward.1} parent=1 // pred_region
      %s214 = ssub.s32 128, 128
      %215 = vsyncadd [#allocation3], %s214
      %s217 = sshll.u32 [#allocation2], 4
      %s218 = int_to_ptr.vmem [resolvable:$true] %s217
      %220 = dma.vmem_to_hbm [thread:$0]  %s218, 128, %s6, [#allocation3]
    $region29: #{mlp_forward.1} parent=1 // pred_fallthru
      _
    // Predicated region
    $region30: #{mlp_forward.1} parent=1 // pred_check
      _
    $region31: #{mlp_forward.1} parent=1 // pred_check_branch
      %222 = sbr.rel (0) target = $region33
    $region32: #{mlp_forward.1} parent=1 // pred_region
      _
    $region33: #{mlp_forward.1} parent=1 // pred_fallthru
      _
    // Predicated region
    $region34: #{mlp_forward.1} parent=1 // pred_check
      _
    $region35: #{mlp_forward.1} parent=1 // pred_check_branch
      %224 = sbr.rel (0) target = $region37
    $region36: #{mlp_forward.1} parent=1 // pred_region
      %225 = dma.done [#allocation3], 128
    $region37: #{mlp_forward.1} parent=1 // pred_fallthru
      _
    %226 = vsyncpa [#allocation3], 1

</llo_original>
